<compile_context>
chip_gen: v5e
topology: v5e:2x2
jax: 0.10.0
libtpu: 0.0.40
codegen_flags: <defaults>
</compile_context>

<pallas_src>
import functools

import jax
import jax.numpy as jnp
from jax.experimental import pallas as pl
from jax.experimental.pallas import tpu as pltpu

LN_EPS = 1e-5  # PyTorch nn.LayerNorm default


def clip_encoder_layer_kernel(
    x_ref,
    ln1_w_ref, ln1_b_ref,
    wqkv_ref, bqkv_ref,          # (3*inner, D) bf16, (3*inner, 1) f32  (q rows pre-scaled)
    wo_ref, bo_ref,              # (inner, D) bf16, (1, D) f32
    ln2_w_ref, ln2_b_ref,
    w1_ref, b1_ref, w2_ref, b2_ref,
    out_ref,
    *, num_heads, head_dim, use_quick_gelu, bf16_transcendentals,
):
    f32 = jnp.float32
    bf16 = jnp.bfloat16
    inner = num_heads * head_dim

    x = x_ref[0]                 # (S, D) float32
    S = x.shape[0]

    def layer_norm(v, w, b):     # statistics in f32
        mu = jnp.mean(v, axis=-1, keepdims=True)
        c = v - mu
        var = jnp.mean(c * c, axis=-1, keepdims=True)
        return c * jax.lax.rsqrt(var + LN_EPS) * w + b

    # ---- LayerNorm 1 ----
    h = layer_norm(x, ln1_w_ref[...], ln1_b_ref[...])

    # ---- fused QKV projection, feature-major ("transposed") layout ----
    # qkv_t[r, s] = sum_d wqkv_t[r, d] * h[s, d]  ->  (3*inner, S), f32 accumulation.
    # The 1/sqrt(head_dim) scale is already folded into the q rows (wrapper).
    qkv_t = jax.lax.dot_general(
        wqkv_ref[...], h.astype(bf16),
        (((1,), (1,)), ((), ())),
        preferred_element_type=f32,
    ) + bqkv_ref[...]

    # Zero-copy head split on the sublane axis: (inner, S) -> (H, Dh, S).
    q3 = qkv_t[0 * inner:1 * inner, :].reshape(num_heads, head_dim, S).astype(bf16)
    k3 = qkv_t[1 * inner:2 * inner, :].reshape(num_heads, head_dim, S).astype(bf16)
    v3 = qkv_t[2 * inner:3 * inner, :].reshape(num_heads, head_dim, S).astype(bf16)

    # s[h, i, j] = sum_d q3[h, d, i] * k3[h, d, j]  (MXU contracts over Dh; no transposes)
    s = jax.lax.dot_general(q3, k3, (((1,), (1,)), ((0,), (0,))),
                            preferred_element_type=f32)            # (H, S, S)
    s = s - jnp.max(s, axis=-1, keepdims=True)
    if bf16_transcendentals:
        p = jnp.exp(s.astype(bf16)).astype(f32)                    # bf16 EUP, f32 sum
    else:
        p = jnp.exp(s)
    p = p * pl.reciprocal(jnp.sum(p, axis=-1, keepdims=True), approx=True)

    # o_t[h, d, i] = sum_j v3[h, d, j] * p[h, i, j]
    o_t = jax.lax.dot_general(v3, p.astype(bf16), (((2,), (2,)), ((0,), (0,))),
                              preferred_element_type=f32)          # (H, Dh, S)
    o_t = o_t.reshape(inner, S)                                    # zero-copy head merge

    # attn[s, d] = sum_r o_t[r, s] * wo[r, d]  ->  (S, D), no transpose needed.
    attn = jax.lax.dot_general(o_t.astype(bf16), wo_ref[...],
                               (((0,), (0,)), ((), ())),
                               preferred_element_type=f32) + bo_ref[...]
    h1 = x + attn                                                  # residual 1 (f32)

    # ---- LayerNorm 2 + MLP ----
    h2 = layer_norm(h1, ln2_w_ref[...], ln2_b_ref[...])
    f = jnp.dot(h2.astype(bf16), w1_ref[...], preferred_element_type=f32) + b1_ref[...]
    if use_quick_gelu:
        if bf16_transcendentals:
            f_bf = f.astype(bf16)
            act = f_bf * jax.nn.sigmoid(1.702 * f_bf)              # bf16 EUP gate
        else:
            act = (f * jax.nn.sigmoid(1.702 * f)).astype(bf16)
    else:
        act = jax.nn.gelu(f).astype(bf16)
    f = jnp.dot(act, w2_ref[...], preferred_element_type=f32) + b2_ref[...]

    # Lane-dense full-D store (real CLIP D is a multiple of 128 -> unmasked vst).
    out_ref[0] = (h1 + f).astype(out_ref.dtype)


def _vmem_capacity_bytes():
    try:
        return int(pltpu.get_tpu_info().vmem_capacity_bytes)
    except Exception:
        return 128 * 2 ** 20     # v5e/v6e default; conservative only for v7x fallback


def _has_bf16_eup():
    # v5e has no bf16 VPU/EUP; keep transcendentals in f32 there.
    try:
        kind = jax.devices()[0].device_kind.lower()
    except Exception:
        return True
    return not ("v5 lite" in kind or "v5lite" in kind or "v5e" in kind)


def clip_encoder_layer(x, params, *, num_heads, head_dim, use_quick_gelu=True):
    B, S, D = x.shape
    inner = num_heads * head_dim
    I = params["w1"].shape[1]
    bf16 = jnp.bfloat16

    # One-time weight packing: fused QKV in nn.Linear (out, in) orientation, the
    # attention scale folded into the q rows, matmul weights cast to bf16,
    # biases / LN params kept in f32.
    scale = 1.0 / (head_dim ** 0.5)
    wqkv_t = jnp.concatenate(
        [(params["wq"] * scale).T, params["wk"].T, params["wv"].T],
        axis=0).astype(bf16)                                               # (3*inner, D)
    bqkv_t = jnp.concatenate(
        [params["bq"] * scale, params["bk"], params["bv"]],
        axis=1).reshape(3 * inner, 1)                                      # (3*inner, 1)

    args = (
        x,
        params["ln1_w"], params["ln1_b"],
        wqkv_t, bqkv_t,
        params["wo"].astype(bf16), params["bo"],
        params["ln2_w"], params["ln2_b"],
        params["w1"].astype(bf16), params["b1"],
        params["w2"].astype(bf16), params["b2"],
    )

    kernel = functools.partial(
        clip_encoder_layer_kernel,
        num_heads=num_heads, head_dim=head_dim, use_quick_gelu=use_quick_gelu,
        bf16_transcendentals=_has_bf16_eup(),
    )

    # Generation-aware VMEM budget: resident single-buffered weights +
    # double-buffered x/out blocks + in-kernel intermediates, with headroom;
    # cap at ~80% of physical VMEM (≈52 MiB on v7x, ≈102 MiB on v5e/v6e).
    weight_bytes = sum(int(a.size) * a.dtype.itemsize for a in args[1:])
    act_bytes = 4 * S * (3 * inner + num_heads * S + I + 6 * D)
    vmem_request = weight_bytes + 4 * S * D * 4 + 2 * act_bytes
    vmem_ceiling = max(24 * 2 ** 20, int(_vmem_capacity_bytes() * 0.8))
    vmem_limit = int(min(vmem_ceiling, max(32 * 2 ** 20, vmem_request)))

    def build(single_buffer_weights):
        def const_spec(shape):
            index_map = lambda b: (0,) * len(shape)
            if single_buffer_weights:
                # grid-invariant block: one resident VMEM copy (no double buffer)
                return pl.BlockSpec(shape, index_map, pipeline_mode=pl.Buffered(1))
            return pl.BlockSpec(shape, index_map)

        in_specs = [
            pl.BlockSpec((1, S, D), lambda b: (b, 0, 0)),            # hidden_states
            const_spec((1, D)), const_spec((1, D)),                  # ln1 w, b
            const_spec((3 * inner, D)), const_spec((3 * inner, 1)),  # fused qkv
            const_spec((inner, D)), const_spec((1, D)),              # out proj
            const_spec((1, D)), const_spec((1, D)),                  # ln2 w, b
            const_spec((D, I)), const_spec((1, I)),                  # fc1
            const_spec((I, D)), const_spec((1, D)),                  # fc2
        ]
        return pl.pallas_call(
            kernel,
            out_shape=jax.ShapeDtypeStruct((B, S, D), x.dtype),
            grid_spec=pltpu.PrefetchScalarGridSpec(
                num_scalar_prefetch=0,
                grid=(B,),
                in_specs=in_specs,
                out_specs=pl.BlockSpec((1, S, D), lambda b: (b, 0, 0)),
            ),
            compiler_params=pltpu.CompilerParams(
                dimension_semantics=("parallel",),   # batch is embarrassingly parallel
                vmem_limit_bytes=vmem_limit,
            ),
        )

    try:
        return build(True)(*args)
    except (TypeError, NotImplementedError):
        # API-compat fallback only (pipeline_mode / Buffered(1) unsupported).
        # Genuine compile / VMEM errors propagate instead of being swallowed.
        return build(False)(*args)


def make_params(key, embed_dim, intermediate_size, num_heads, head_dim):
    inner = num_heads * head_dim
    keys = jax.random.split(key, 12)

    def w(k, shape, scale=0.02):
        return (scale * jax.random.normal(k, shape)).astype(jnp.float32)

    return {
        "ln1_w": jnp.ones((1, embed_dim), jnp.float32),
        "ln1_b": jnp.zeros((1, embed_dim), jnp.float32),
        # weights stored (in, out), i.e. already transposed relative to nn.Linear.weight
        "wq": w(keys[0], (embed_dim, inner)), "bq": w(keys[1], (1, inner)),
        "wk": w(keys[2], (embed_dim, inner)), "bk": w(keys[3], (1, inner)),
        "wv": w(keys[4], (embed_dim, inner)), "bv": w(keys[5], (1, inner)),
        "wo": w(keys[6], (inner, embed_dim)), "bo": w(keys[7], (1, embed_dim)),
        "ln2_w": jnp.ones((1, embed_dim), jnp.float32),
        "ln2_b": jnp.zeros((1, embed_dim), jnp.float32),
        "w1": w(keys[8], (embed_dim, intermediate_size)), "b1": w(keys[9], (1, intermediate_size)),
        "w2": w(keys[10], (intermediate_size, embed_dim)), "b2": w(keys[11], (1, embed_dim)),
    }


def reference(x, p, *, num_heads, head_dim, use_quick_gelu=True):
    """Pure-JAX f32 reference matching the PyTorch forward."""
    def ln(v, w, b):
        mu = jnp.mean(v, -1, keepdims=True)
        var = jnp.mean((v - mu) ** 2, -1, keepdims=True)
        return (v - mu) * jax.lax.rsqrt(var + LN_EPS) * w + b

    B, S, D = x.shape
    h = ln(x, p["ln1_w"], p["ln1_b"])
    q = h @ p["wq"] + p["bq"]
    k = h @ p["wk"] + p["bk"]
    v = h @ p["wv"] + p["bv"]
    q = q.reshape(B, S, num_heads, head_dim).transpose(0, 2, 1, 3)
    k = k.reshape(B, S, num_heads, head_dim).transpose(0, 2, 1, 3)
    v = v.reshape(B, S, num_heads, head_dim).transpose(0, 2, 1, 3)
    s = jnp.einsum("bhqd,bhkd->bhqk", q, k) / (head_dim ** 0.5)
    p_attn = jax.nn.softmax(s, axis=-1)
    o = jnp.einsum("bhqk,bhkd->bhqd", p_attn, v).transpose(0, 2, 1, 3).reshape(B, S, -1)
    o = o @ p["wo"] + p["bo"]
    h1 = x + o
    h2 = ln(h1, p["ln2_w"], p["ln2_b"])
    f = h2 @ p["w1"] + p["b1"]
    if use_quick_gelu:
        f = f * jax.nn.sigmoid(1.702 * f)
    else:
        f = jax.nn.gelu(f)
    f = f @ p["w2"] + p["b2"]
    return h1 + f


if __name__ == "__main__":
    # Small, module-consistent shapes.
    B, S = 2, 8
    embed_dim = 32
    num_heads = 4
    head_dim = 8
    intermediate_size = 64

    key = jax.random.PRNGKey(0)
    k_x, k_p = jax.random.split(key)
    x = jax.random.normal(k_x, (B, S, embed_dim), dtype=jnp.float32)
    params = make_params(k_p, embed_dim, intermediate_size, num_heads, head_dim)

    out = clip_encoder_layer(x, params, num_heads=num_heads, head_dim=head_dim,
                             use_quick_gelu=True)
    out = jax.block_until_ready(out)

    ref = reference(x, params, num_heads=num_heads, head_dim=head_dim, use_quick_gelu=True)
    assert out.shape == (B, S, embed_dim)
    # bf16 matmul operands / transcendentals (f32 accumulation) + approx softmax
    # reciprocal -> looser tolerance.
    assert jnp.allclose(out, ref, atol=1e-2, rtol=1e-2), "mismatch vs pure-JAX reference"

    print("KERNEL_OK")
</pallas_src>

<mosaic_0001>
module attributes {stable_mosaic.version = 11 : i64} {
  func.func @clip_encoder_layer_kernel(%arg0: i32, %arg1: memref<1x8x32xf32, #tpu.memory_space<vmem>>, %arg2: memref<1x32xf32, #tpu.memory_space<vmem>>, %arg3: memref<1x32xf32, #tpu.memory_space<vmem>>, %arg4: memref<96x32xbf16, #tpu.memory_space<vmem>>, %arg5: memref<96x1xf32, #tpu.memory_space<vmem>>, %arg6: memref<32x32xbf16, #tpu.memory_space<vmem>>, %arg7: memref<1x32xf32, #tpu.memory_space<vmem>>, %arg8: memref<1x32xf32, #tpu.memory_space<vmem>>, %arg9: memref<1x32xf32, #tpu.memory_space<vmem>>, %arg10: memref<32x64xbf16, #tpu.memory_space<vmem>>, %arg11: memref<1x64xf32, #tpu.memory_space<vmem>>, %arg12: memref<64x32xbf16, #tpu.memory_space<vmem>>, %arg13: memref<1x32xf32, #tpu.memory_space<vmem>>, %arg14: memref<1x8x32xf32, #tpu.memory_space<vmem>>) attributes {dimension_semantics = [#tpu.dimension_semantics<parallel>], iteration_bounds = array<i64: 2>, scalar_prefetch = 0 : i64, scratch_operands = 0 : i64, tpu.core_type = #tpu.core_type<tc>, window_params = [{transform_indices = @transform_0, window_bounds = array<i64: 1, 8, 32>}, {pipeline_mode = #tpu.pipeline_mode<synchronous>, transform_indices = @transform_1, window_bounds = array<i64: 1, 32>}, {pipeline_mode = #tpu.pipeline_mode<synchronous>, transform_indices = @transform_2, window_bounds = array<i64: 1, 32>}, {pipeline_mode = #tpu.pipeline_mode<synchronous>, transform_indices = @transform_3, window_bounds = array<i64: 96, 32>}, {pipeline_mode = #tpu.pipeline_mode<synchronous>, transform_indices = @transform_4, window_bounds = array<i64: 96, 1>}, {pipeline_mode = #tpu.pipeline_mode<synchronous>, transform_indices = @transform_5, window_bounds = array<i64: 32, 32>}, {pipeline_mode = #tpu.pipeline_mode<synchronous>, transform_indices = @transform_6, window_bounds = array<i64: 1, 32>}, {pipeline_mode = #tpu.pipeline_mode<synchronous>, transform_indices = @transform_7, window_bounds = array<i64: 1, 32>}, {pipeline_mode = #tpu.pipeline_mode<synchronous>, transform_indices = @transform_8, window_bounds = array<i64: 1, 32>}, {pipeline_mode = #tpu.pipeline_mode<synchronous>, transform_indices = @transform_9, window_bounds = array<i64: 32, 64>}, {pipeline_mode = #tpu.pipeline_mode<synchronous>, transform_indices = @transform_10, window_bounds = array<i64: 1, 64>}, {pipeline_mode = #tpu.pipeline_mode<synchronous>, transform_indices = @transform_11, window_bounds = array<i64: 64, 32>}, {pipeline_mode = #tpu.pipeline_mode<synchronous>, transform_indices = @transform_12, window_bounds = array<i64: 1, 32>}, {transform_indices = @transform_13, window_bounds = array<i64: 1, 8, 32>}]} {
    %c0 = arith.constant 0 : index
    %c0_0 = arith.constant 0 : index
    %c0_1 = arith.constant 0 : index
    %0 = vector.load %arg1[%c0, %c0_0, %c0_1] : memref<1x8x32xf32, #tpu.memory_space<vmem>>, vector<1x8x32xf32>
    %1 = vector.shape_cast %0 : vector<1x8x32xf32> to vector<8x32xf32>
    %c0_2 = arith.constant 0 : index
    %c0_3 = arith.constant 0 : index
    %2 = vector.load %arg2[%c0_2, %c0_3] : memref<1x32xf32, #tpu.memory_space<vmem>>, vector<1x32xf32>
    %c0_4 = arith.constant 0 : index
    %c0_5 = arith.constant 0 : index
    %3 = vector.load %arg3[%c0_4, %c0_5] : memref<1x32xf32, #tpu.memory_space<vmem>>, vector<1x32xf32>
    %cst = arith.constant dense<0.000000e+00> : vector<8xf32>
    %4 = vector.multi_reduction <add>, %1, %cst [1] : vector<8x32xf32> to vector<8xf32>
    %5 = vector.shape_cast %4 : vector<8xf32> to vector<8x1xf32>
    %cst_6 = arith.constant 3.200000e+01 : f32
    %6 = vector.broadcast %cst_6 : f32 to vector<8x1xf32>
    %7 = arith.divf %5, %6 : vector<8x1xf32>
    %8 = vector.broadcast %7 : vector<8x1xf32> to vector<8x32xf32>
    %9 = arith.subf %1, %8 : vector<8x32xf32>
    %10 = arith.mulf %9, %9 : vector<8x32xf32>
    %cst_7 = arith.constant dense<0.000000e+00> : vector<8xf32>
    %11 = vector.multi_reduction <add>, %10, %cst_7 [1] : vector<8x32xf32> to vector<8xf32>
    %12 = vector.shape_cast %11 : vector<8xf32> to vector<8x1xf32>
    %cst_8 = arith.constant 3.200000e+01 : f32
    %13 = vector.broadcast %cst_8 : f32 to vector<8x1xf32>
    %14 = arith.divf %12, %13 : vector<8x1xf32>
    %cst_9 = arith.constant 9.99999974E-6 : f32
    %15 = vector.broadcast %cst_9 : f32 to vector<8x1xf32>
    %16 = arith.addf %14, %15 : vector<8x1xf32>
    %17 = math.rsqrt %16 : vector<8x1xf32>
    %18 = vector.broadcast %17 : vector<8x1xf32> to vector<8x32xf32>
    %19 = arith.mulf %9, %18 : vector<8x32xf32>
    %20 = vector.broadcast %2 : vector<1x32xf32> to vector<8x32xf32>
    %21 = arith.mulf %19, %20 : vector<8x32xf32>
    %22 = vector.broadcast %3 : vector<1x32xf32> to vector<8x32xf32>
    %23 = arith.addf %21, %22 : vector<8x32xf32>
    %c0_10 = arith.constant 0 : index
    %c0_11 = arith.constant 0 : index
    %24 = vector.load %arg4[%c0_10, %c0_11] : memref<96x32xbf16, #tpu.memory_space<vmem>>, vector<96x32xbf16>
    %25 = arith.truncf %23 : vector<8x32xf32> to vector<8x32xbf16>
    %cst_12 = arith.constant dense<0.000000e+00> : vector<96x8xf32>
    %26 = tpu.matmul %24, %25, %cst_12 {dimension_numbers = #tpu.dot_dimension_numbers<[1], [1], [0], [0], [0, 0, 1, 0], [], []>} : vector<96x32xbf16>, vector<8x32xbf16>, vector<96x8xf32> -> vector<96x8xf32>
    %c0_13 = arith.constant 0 : index
    %c0_14 = arith.constant 0 : index
    %27 = vector.load %arg5[%c0_13, %c0_14] : memref<96x1xf32, #tpu.memory_space<vmem>>, vector<96x1xf32>
    %28 = vector.broadcast %27 : vector<96x1xf32> to vector<96x8xf32>
    %29 = arith.addf %26, %28 : vector<96x8xf32>
    %30 = vector.extract_strided_slice %29 {offsets = [0, 0], sizes = [32, 8], strides = [1, 1]} : vector<96x8xf32> to vector<32x8xf32>
    %31 = vector.shape_cast %30 : vector<32x8xf32> to vector<4x8x8xf32>
    %32 = arith.truncf %31 : vector<4x8x8xf32> to vector<4x8x8xbf16>
    %33 = vector.extract_strided_slice %29 {offsets = [32, 0], sizes = [32, 8], strides = [1, 1]} : vector<96x8xf32> to vector<32x8xf32>
    %34 = vector.shape_cast %33 : vector<32x8xf32> to vector<4x8x8xf32>
    %35 = arith.truncf %34 : vector<4x8x8xf32> to vector<4x8x8xbf16>
    %36 = vector.extract_strided_slice %29 {offsets = [64, 0], sizes = [32, 8], strides = [1, 1]} : vector<96x8xf32> to vector<32x8xf32>
    %37 = vector.shape_cast %36 : vector<32x8xf32> to vector<4x8x8xf32>
    %38 = arith.truncf %37 : vector<4x8x8xf32> to vector<4x8x8xbf16>
    %cst_15 = arith.constant dense<0.000000e+00> : vector<4x8x8xf32>
    %39 = tpu.matmul %32, %35, %cst_15 {dimension_numbers = #tpu.dot_dimension_numbers<[1], [1], [2], [2], [0, 0, 0, 2, 1, 2], [0], [0]>} : vector<4x8x8xbf16>, vector<4x8x8xbf16>, vector<4x8x8xf32> -> vector<4x8x8xf32>
    %cst_16 = arith.constant dense<0xFF800000> : vector<4x8xf32>
    %40 = vector.multi_reduction <maximumf>, %39, %cst_16 [2] : vector<4x8x8xf32> to vector<4x8xf32>
    %41 = vector.shape_cast %40 : vector<4x8xf32> to vector<4x8x1xf32>
    %42 = vector.broadcast %41 : vector<4x8x1xf32> to vector<4x8x8xf32>
    %43 = arith.subf %39, %42 : vector<4x8x8xf32>
    %44 = arith.truncf %43 : vector<4x8x8xf32> to vector<4x8x8xbf16>
    %45 = math.exp %44 : vector<4x8x8xbf16>
    %46 = arith.extf %45 : vector<4x8x8xbf16> to vector<4x8x8xf32>
    %cst_17 = arith.constant dense<0.000000e+00> : vector<4x8xf32>
    %47 = vector.multi_reduction <add>, %46, %cst_17 [2] : vector<4x8x8xf32> to vector<4x8xf32>
    %48 = vector.shape_cast %47 : vector<4x8xf32> to vector<4x8x1xf32>
    %49 = tpu.reciprocal %48 {approx = true} : vector<4x8x1xf32> -> vector<4x8x1xf32>
    %50 = vector.broadcast %49 : vector<4x8x1xf32> to vector<4x8x8xf32>
    %51 = arith.mulf %46, %50 : vector<4x8x8xf32>
    %52 = arith.truncf %51 : vector<4x8x8xf32> to vector<4x8x8xbf16>
    %cst_18 = arith.constant dense<0.000000e+00> : vector<4x8x8xf32>
    %53 = tpu.matmul %38, %52, %cst_18 {dimension_numbers = #tpu.dot_dimension_numbers<[2], [2], [1], [1], [0, 0, 0, 1, 1, 1], [0], [0]>} : vector<4x8x8xbf16>, vector<4x8x8xbf16>, vector<4x8x8xf32> -> vector<4x8x8xf32>
    %54 = vector.shape_cast %53 : vector<4x8x8xf32> to vector<32x8xf32>
    %55 = arith.truncf %54 : vector<32x8xf32> to vector<32x8xbf16>
    %c0_19 = arith.constant 0 : index
    %c0_20 = arith.constant 0 : index
    %56 = vector.load %arg6[%c0_19, %c0_20] : memref<32x32xbf16, #tpu.memory_space<vmem>>, vector<32x32xbf16>
    %cst_21 = arith.constant dense<0.000000e+00> : vector<8x32xf32>
    %57 = tpu.matmul %55, %56, %cst_21 {dimension_numbers = #tpu.dot_dimension_numbers<[0], [0], [1], [1], [0, 1, 1, 1], [], []>} : vector<32x8xbf16>, vector<32x32xbf16>, vector<8x32xf32> -> vector<8x32xf32>
    %c0_22 = arith.constant 0 : index
    %c0_23 = arith.constant 0 : index
    %58 = vector.load %arg7[%c0_22, %c0_23] : memref<1x32xf32, #tpu.memory_space<vmem>>, vector<1x32xf32>
    %59 = vector.broadcast %58 : vector<1x32xf32> to vector<8x32xf32>
    %60 = arith.addf %57, %59 : vector<8x32xf32>
    %61 = arith.addf %1, %60 : vector<8x32xf32>
    %c0_24 = arith.constant 0 : index
    %c0_25 = arith.constant 0 : index
    %62 = vector.load %arg8[%c0_24, %c0_25] : memref<1x32xf32, #tpu.memory_space<vmem>>, vector<1x32xf32>
    %c0_26 = arith.constant 0 : index
    %c0_27 = arith.constant 0 : index
    %63 = vector.load %arg9[%c0_26, %c0_27] : memref<1x32xf32, #tpu.memory_space<vmem>>, vector<1x32xf32>
    %cst_28 = arith.constant dense<0.000000e+00> : vector<8xf32>
    %64 = vector.multi_reduction <add>, %61, %cst_28 [1] : vector<8x32xf32> to vector<8xf32>
    %65 = vector.shape_cast %64 : vector<8xf32> to vector<8x1xf32>
    %cst_29 = arith.constant 3.200000e+01 : f32
    %66 = vector.broadcast %cst_29 : f32 to vector<8x1xf32>
    %67 = arith.divf %65, %66 : vector<8x1xf32>
    %68 = vector.broadcast %67 : vector<8x1xf32> to vector<8x32xf32>
    %69 = arith.subf %61, %68 : vector<8x32xf32>
    %70 = arith.mulf %69, %69 : vector<8x32xf32>
    %cst_30 = arith.constant dense<0.000000e+00> : vector<8xf32>
    %71 = vector.multi_reduction <add>, %70, %cst_30 [1] : vector<8x32xf32> to vector<8xf32>
    %72 = vector.shape_cast %71 : vector<8xf32> to vector<8x1xf32>
    %cst_31 = arith.constant 3.200000e+01 : f32
    %73 = vector.broadcast %cst_31 : f32 to vector<8x1xf32>
    %74 = arith.divf %72, %73 : vector<8x1xf32>
    %cst_32 = arith.constant 9.99999974E-6 : f32
    %75 = vector.broadcast %cst_32 : f32 to vector<8x1xf32>
    %76 = arith.addf %74, %75 : vector<8x1xf32>
    %77 = math.rsqrt %76 : vector<8x1xf32>
    %78 = vector.broadcast %77 : vector<8x1xf32> to vector<8x32xf32>
    %79 = arith.mulf %69, %78 : vector<8x32xf32>
    %80 = vector.broadcast %62 : vector<1x32xf32> to vector<8x32xf32>
    %81 = arith.mulf %79, %80 : vector<8x32xf32>
    %82 = vector.broadcast %63 : vector<1x32xf32> to vector<8x32xf32>
    %83 = arith.addf %81, %82 : vector<8x32xf32>
    %84 = arith.truncf %83 : vector<8x32xf32> to vector<8x32xbf16>
    %c0_33 = arith.constant 0 : index
    %c0_34 = arith.constant 0 : index
    %85 = vector.load %arg10[%c0_33, %c0_34] : memref<32x64xbf16, #tpu.memory_space<vmem>>, vector<32x64xbf16>
    %cst_35 = arith.constant dense<0.000000e+00> : vector<8x64xf32>
    %86 = tpu.matmul %84, %85, %cst_35 {dimension_numbers = #tpu.dot_dimension_numbers<[1], [0], [0], [1], [0, 0, 1, 1], [], []>} : vector<8x32xbf16>, vector<32x64xbf16>, vector<8x64xf32> -> vector<8x64xf32>
    %c0_36 = arith.constant 0 : index
    %c0_37 = arith.constant 0 : index
    %87 = vector.load %arg11[%c0_36, %c0_37] : memref<1x64xf32, #tpu.memory_space<vmem>>, vector<1x64xf32>
    %88 = vector.broadcast %87 : vector<1x64xf32> to vector<8x64xf32>
    %89 = arith.addf %86, %88 : vector<8x64xf32>
    %90 = arith.truncf %89 : vector<8x64xf32> to vector<8x64xbf16>
    %cst_38 = arith.constant 1.703130e+00 : bf16
    %91 = vector.broadcast %cst_38 : bf16 to vector<8x64xbf16>
    %92 = arith.mulf %91, %90 : vector<8x64xbf16>
    %93 = arith.negf %92 : vector<8x64xbf16>
    %94 = math.exp %93 : vector<8x64xbf16>
    %cst_39 = arith.constant 1.000000e+00 : bf16
    %95 = vector.broadcast %cst_39 : bf16 to vector<8x64xbf16>
    %96 = arith.addf %95, %94 : vector<8x64xbf16>
    %97 = arith.divf %95, %96 : vector<8x64xbf16>
    %98 = arith.mulf %90, %97 : vector<8x64xbf16>
    %c0_40 = arith.constant 0 : index
    %c0_41 = arith.constant 0 : index
    %99 = vector.load %arg12[%c0_40, %c0_41] : memref<64x32xbf16, #tpu.memory_space<vmem>>, vector<64x32xbf16>
    %cst_42 = arith.constant dense<0.000000e+00> : vector<8x32xf32>
    %100 = tpu.matmul %98, %99, %cst_42 {dimension_numbers = #tpu.dot_dimension_numbers<[1], [0], [0], [1], [0, 0, 1, 1], [], []>} : vector<8x64xbf16>, vector<64x32xbf16>, vector<8x32xf32> -> vector<8x32xf32>
    %c0_43 = arith.constant 0 : index
    %c0_44 = arith.constant 0 : index
    %101 = vector.load %arg13[%c0_43, %c0_44] : memref<1x32xf32, #tpu.memory_space<vmem>>, vector<1x32xf32>
    %102 = vector.broadcast %101 : vector<1x32xf32> to vector<8x32xf32>
    %103 = arith.addf %100, %102 : vector<8x32xf32>
    %104 = arith.addf %61, %103 : vector<8x32xf32>
    %c0_45 = arith.constant 0 : index
    %c0_46 = arith.constant 0 : index
    %c0_47 = arith.constant 0 : index
    %105 = vector.load %arg14[%c0_45, %c0_46, %c0_47] : memref<1x8x32xf32, #tpu.memory_space<vmem>>, vector<1x8x32xf32>
    %106 = vector.shape_cast %105 : vector<1x8x32xf32> to vector<8x32xf32>
    %107 = vector.shape_cast %104 : vector<8x32xf32> to vector<1x8x32xf32>
    tpu.vector_store %arg14[%c0_45, %c0_46, %c0_47], %107 {strides = array<i32>} : memref<1x8x32xf32, #tpu.memory_space<vmem>>, vector<1x8x32xf32>,
    return
  }
  func.func @transform_0(%arg0: i32) -> (i32, i32, i32) {
    %c0_i32 = arith.constant 0 : i32
    %c0_i32_0 = arith.constant 0 : i32
    %c0_i32_1 = arith.constant 0 : i32
    return %arg0, %c0_i32, %c0_i32_0 : i32, i32, i32
  }
  func.func @transform_1(%arg0: i32) -> (i32, i32) {
    %c0_i32 = arith.constant 0 : i32
    %c0_i32_0 = arith.constant 0 : i32
    %c0_i32_1 = arith.constant 0 : i32
    return %c0_i32, %c0_i32_0 : i32, i32
  }
  func.func @transform_2(%arg0: i32) -> (i32, i32) {
    %c0_i32 = arith.constant 0 : i32
    %c0_i32_0 = arith.constant 0 : i32
    %c0_i32_1 = arith.constant 0 : i32
    return %c0_i32, %c0_i32_0 : i32, i32
  }
  func.func @transform_3(%arg0: i32) -> (i32, i32) {
    %c0_i32 = arith.constant 0 : i32
    %c0_i32_0 = arith.constant 0 : i32
    %c0_i32_1 = arith.constant 0 : i32
    return %c0_i32, %c0_i32_0 : i32, i32
  }
  func.func @transform_4(%arg0: i32) -> (i32, i32) {
    %c0_i32 = arith.constant 0 : i32
    %c0_i32_0 = arith.constant 0 : i32
    %c0_i32_1 = arith.constant 0 : i32
    return %c0_i32, %c0_i32_0 : i32, i32
  }
  func.func @transform_5(%arg0: i32) -> (i32, i32) {
    %c0_i32 = arith.constant 0 : i32
    %c0_i32_0 = arith.constant 0 : i32
    %c0_i32_1 = arith.constant 0 : i32
    return %c0_i32, %c0_i32_0 : i32, i32
  }
  func.func @transform_6(%arg0: i32) -> (i32, i32) {
    %c0_i32 = arith.constant 0 : i32
    %c0_i32_0 = arith.constant 0 : i32
    %c0_i32_1 = arith.constant 0 : i32
    return %c0_i32, %c0_i32_0 : i32, i32
  }
  func.func @transform_7(%arg0: i32) -> (i32, i32) {
    %c0_i32 = arith.constant 0 : i32
    %c0_i32_0 = arith.constant 0 : i32
    %c0_i32_1 = arith.constant 0 : i32
    return %c0_i32, %c0_i32_0 : i32, i32
  }
  func.func @transform_8(%arg0: i32) -> (i32, i32) {
    %c0_i32 = arith.constant 0 : i32
    %c0_i32_0 = arith.constant 0 : i32
    %c0_i32_1 = arith.constant 0 : i32
    return %c0_i32, %c0_i32_0 : i32, i32
  }
  func.func @transform_9(%arg0: i32) -> (i32, i32) {
    %c0_i32 = arith.constant 0 : i32
    %c0_i32_0 = arith.constant 0 : i32
    %c0_i32_1 = arith.constant 0 : i32
    return %c0_i32, %c0_i32_0 : i32, i32
  }
  func.func @transform_10(%arg0: i32) -> (i32, i32) {
    %c0_i32 = arith.constant 0 : i32
    %c0_i32_0 = arith.constant 0 : i32
    %c0_i32_1 = arith.constant 0 : i32
    return %c0_i32, %c0_i32_0 : i32, i32
  }
  func.func @transform_11(%arg0: i32) -> (i32, i32) {
    %c0_i32 = arith.constant 0 : i32
    %c0_i32_0 = arith.constant 0 : i32
    %c0_i32_1 = arith.constant 0 : i32
    return %c0_i32, %c0_i32_0 : i32, i32
  }
  func.func @transform_12(%arg0: i32) -> (i32, i32) {
    %c0_i32 = arith.constant 0 : i32
    %c0_i32_0 = arith.constant 0 : i32
    %c0_i32_1 = arith.constant 0 : i32
    return %c0_i32, %c0_i32_0 : i32, i32
  }
  func.func @transform_13(%arg0: i32) -> (i32, i32, i32) {
    %c0_i32 = arith.constant 0 : i32
    %c0_i32_0 = arith.constant 0 : i32
    %c0_i32_1 = arith.constant 0 : i32
    return %arg0, %c0_i32, %c0_i32_0 : i32, i32, i32
  }
}

</mosaic_0001>

<llo_original>
// kernel: tpu_custom_call.1
$region0: #{tpu_custom_call.1}
  #allocation0 [shape = 'u32[]', space=smem, size = 0x4, offset = 0x4, fixed_abs, tag = 'smem constant byte address 0x4 - core index']
  #allocation1 [shape = 'u32[72,128]{1,0:T(1,128)}', space=vmem, size = 0x9000, scoped, tag = 'internal scratch']
  %s0 = inlined_call_operand.vmem [shape: f32[2,8,32], index: 0, kind: input, shape index: {}]
  %s1 = inlined_call_operand.vmem [shape: f32[1,32], index: 1, kind: input, shape index: {}]
  %s2 = inlined_call_operand.vmem [shape: f32[1,32], index: 2, kind: input, shape index: {}]
  %s3 = inlined_call_operand.vmem [shape: bf16[96,32], index: 3, kind: input, shape index: {}]
  %s4 = inlined_call_operand.vmem [shape: f32[96,1], index: 4, kind: input, shape index: {}]
  %s5 = inlined_call_operand.vmem [shape: bf16[32,32], index: 5, kind: input, shape index: {}]
  %s6 = inlined_call_operand.vmem [shape: f32[1,32], index: 6, kind: input, shape index: {}]
  %s7 = inlined_call_operand.vmem [shape: f32[1,32], index: 7, kind: input, shape index: {}]
  %s8 = inlined_call_operand.vmem [shape: f32[1,32], index: 8, kind: input, shape index: {}]
  %s9 = inlined_call_operand.vmem [shape: bf16[32,64], index: 9, kind: input, shape index: {}]
  %s10 = inlined_call_operand.vmem [shape: f32[1,64], index: 10, kind: input, shape index: {}]
  %s11 = inlined_call_operand.vmem [shape: bf16[64,32], index: 11, kind: input, shape index: {}]
  %s12 = inlined_call_operand.vmem [shape: f32[1,32], index: 12, kind: input, shape index: {}]
  %s13 = inlined_call_operand.hbm [shape: f32[2,8,32], index: 13, kind: output, shape index: {}]
  %s14 = sld [smem:[#allocation0]]
  $region85: #{tpu_custom_call.1} parent=0
    _
  %s16 = ssub.s32 1, %s14
  %s17 = scalar_select 0, %s16, %s14
  $region1: #{tpu_custom_call.1} parent=0
    #allocation2 [shape = 'u8[8192]{0}', space=vmem, size = 0x2000, scoped, tag = 'output window, operand 0']
    #allocation3 [shape = 's32[2]{0}', space=sflag, size = 0x8, scoped, tag = 'scoped memory for tpu_custom_call.1']
    %18 = vsyncpa [#allocation3], 0
    %s19 = scalar_lea.sflag [#allocation3], 1
    %20 = vsyncpa %s19, 0
    loop: start=0, step=1, limit=4
    $region2: #{tpu_custom_call.1} parent=1 // loop_pre_header
      _
    $region3: #{tpu_custom_call.1} parent=1 // loop_header
      %s22 = sphi 0, %s26
      %p23 = scmp.ge.s32.totalorder %s22, 4
      %s32 = sphi 0, %s34
      %s35 = sphi 0, %s32
      %s36 = sphi 0, %s35
      %s52 = sphi 0, %s36
      %s56 = sphi 0, %s56
      %s58 = sphi 0, %s56
      %s59 = sphi 0, %s58
      %s73 = sphi 0, %s59
      %s77 = sphi 0, %s77
      %s79 = sphi 0, %s77
      %s80 = sphi 0, %s79
      %s94 = sphi 0, %s80
      %s98 = sphi 0, %s98
      %s100 = sphi 0, %s98
      %s101 = sphi 0, %s100
      %s115 = sphi 0, %s101
      %s119 = sphi 0, %s119
      %s121 = sphi 0, %s119
      %s122 = sphi 0, %s121
      %s136 = sphi 0, %s122
      %s140 = sphi 0, %s140
      %s142 = sphi 0, %s140
      %s143 = sphi 0, %s142
      %s157 = sphi 0, %s143
      %s161 = sphi 0, %s161
      %s163 = sphi 0, %s161
      %s164 = sphi 0, %s163
      %s178 = sphi 0, %s164
      %s182 = sphi 0, %s182
      %s184 = sphi 0, %s182
      %s185 = sphi 0, %s184
      %s199 = sphi 0, %s185
      %s203 = sphi 0, %s203
      %s205 = sphi 0, %s203
      %s206 = sphi 0, %s205
      %s220 = sphi 0, %s206
      %s224 = sphi 0, %s224
      %s226 = sphi 0, %s224
      %s227 = sphi 0, %s226
      %s241 = sphi 0, %s227
      %s245 = sphi 0, %s245
      %s247 = sphi 0, %s245
      %s248 = sphi 0, %s247
      %s262 = sphi 0, %s248
      %s266 = sphi 0, %s266
      %s268 = sphi 0, %s266
      %s269 = sphi 0, %s268
      %s283 = sphi 0, %s269
      %s287 = sphi 0, %s287
      %s289 = sphi 0, %s287
      %s290 = sphi 0, %s289
      %s304 = sphi 0, %s290
      %s310 = sphi 0, %s312
      %s313 = sphi 0, %s310
      %s314 = sphi 0, %s313
      %s330 = sphi 0, %s314
    $region4: #{tpu_custom_call.1} parent=1 // loop_header_branch
      %25 = sbr.rel (%p23) target = $region8
    $region5: #{tpu_custom_call.1} parent=1 // loop_body
      %s27 = ssub.s32 %s22, 1
      %s28 = ssub.s32 %s22, 2
      %s29 = sadd.s32 %s22, 1
      %s30 = ssub.s32 %s22, %s29
      %p31 = scmp.eq.s32.totalorder %s30, 0
      %s33 = sadd.s32 %s32, 1
      %s34 = scalar_select %p31, %s32, %s33
      %p37 = pneg %p31
      %p38 = scmp.eq.s32.totalorder %s22, 1
      %p39 = por %p37, %p38
      %p40 = scmp.ne.s32.totalorder %s32, %s35
      %p41 = scmp.eq.s32.totalorder %s22, 0
      %p42 = por %p40, %p41
      %p43 = scmp.ne.s32.totalorder %s32, %s35
      %p44 = scmp.eq.s32.totalorder %s27, 1
      %p45 = por %p43, %p44
      %p46 = scmp.ne.s32.totalorder %s35, %s36
      %p47 = scmp.eq.s32.totalorder %s27, 0
      %p48 = por %p46, %p47
      %p49 = scmp.ne.s32.totalorder %s35, %s36
      %p50 = scmp.eq.s32.totalorder %s28, 1
      %p51 = por %p49, %p50
      %p53 = scmp.ne.s32.totalorder %s36, %s52
      %p54 = scmp.eq.s32.totalorder %s28, 0
      %p55 = por %p53, %p54
      %s57 = sadd.s32 %s56, 1
      %p60 = scmp.eq.s32.totalorder %s22, 1
      %p61 = scmp.ne.s32.totalorder %s56, %s58
      %p62 = scmp.eq.s32.totalorder %s22, 0
      %p63 = por %p61, %p62
      %p64 = scmp.ne.s32.totalorder %s56, %s58
      %p65 = scmp.eq.s32.totalorder %s27, 1
      %p66 = por %p64, %p65
      %p67 = scmp.ne.s32.totalorder %s58, %s59
      %p68 = scmp.eq.s32.totalorder %s27, 0
      %p69 = por %p67, %p68
      %p70 = scmp.ne.s32.totalorder %s58, %s59
      %p71 = scmp.eq.s32.totalorder %s28, 1
      %p72 = por %p70, %p71
      %p74 = scmp.ne.s32.totalorder %s59, %s73
      %p75 = scmp.eq.s32.totalorder %s28, 0
      %p76 = por %p74, %p75
      %s78 = sadd.s32 %s77, 1
      %p81 = scmp.eq.s32.totalorder %s22, 1
      %p82 = scmp.ne.s32.totalorder %s77, %s79
      %p83 = scmp.eq.s32.totalorder %s22, 0
      %p84 = por %p82, %p83
      %p85 = scmp.ne.s32.totalorder %s77, %s79
      %p86 = scmp.eq.s32.totalorder %s27, 1
      %p87 = por %p85, %p86
      %p88 = scmp.ne.s32.totalorder %s79, %s80
      %p89 = scmp.eq.s32.totalorder %s27, 0
      %p90 = por %p88, %p89
      %p91 = scmp.ne.s32.totalorder %s79, %s80
      %p92 = scmp.eq.s32.totalorder %s28, 1
      %p93 = por %p91, %p92
      %p95 = scmp.ne.s32.totalorder %s80, %s94
      %p96 = scmp.eq.s32.totalorder %s28, 0
      %p97 = por %p95, %p96
      %s99 = sadd.s32 %s98, 1
      %p102 = scmp.eq.s32.totalorder %s22, 1
      %p103 = scmp.ne.s32.totalorder %s98, %s100
      %p104 = scmp.eq.s32.totalorder %s22, 0
      %p105 = por %p103, %p104
      %p106 = scmp.ne.s32.totalorder %s98, %s100
      %p107 = scmp.eq.s32.totalorder %s27, 1
      %p108 = por %p106, %p107
      %p109 = scmp.ne.s32.totalorder %s100, %s101
      %p110 = scmp.eq.s32.totalorder %s27, 0
      %p111 = por %p109, %p110
      %p112 = scmp.ne.s32.totalorder %s100, %s101
      %p113 = scmp.eq.s32.totalorder %s28, 1
      %p114 = por %p112, %p113
      %p116 = scmp.ne.s32.totalorder %s101, %s115
      %p117 = scmp.eq.s32.totalorder %s28, 0
      %p118 = por %p116, %p117
      %s120 = sadd.s32 %s119, 1
      %p123 = scmp.eq.s32.totalorder %s22, 1
      %p124 = scmp.ne.s32.totalorder %s119, %s121
      %p125 = scmp.eq.s32.totalorder %s22, 0
      %p126 = por %p124, %p125
      %p127 = scmp.ne.s32.totalorder %s119, %s121
      %p128 = scmp.eq.s32.totalorder %s27, 1
      %p129 = por %p127, %p128
      %p130 = scmp.ne.s32.totalorder %s121, %s122
      %p131 = scmp.eq.s32.totalorder %s27, 0
      %p132 = por %p130, %p131
      %p133 = scmp.ne.s32.totalorder %s121, %s122
      %p134 = scmp.eq.s32.totalorder %s28, 1
      %p135 = por %p133, %p134
      %p137 = scmp.ne.s32.totalorder %s122, %s136
      %p138 = scmp.eq.s32.totalorder %s28, 0
      %p139 = por %p137, %p138
      %s141 = sadd.s32 %s140, 1
      %p144 = scmp.eq.s32.totalorder %s22, 1
      %p145 = scmp.ne.s32.totalorder %s140, %s142
      %p146 = scmp.eq.s32.totalorder %s22, 0
      %p147 = por %p145, %p146
      %p148 = scmp.ne.s32.totalorder %s140, %s142
      %p149 = scmp.eq.s32.totalorder %s27, 1
      %p150 = por %p148, %p149
      %p151 = scmp.ne.s32.totalorder %s142, %s143
      %p152 = scmp.eq.s32.totalorder %s27, 0
      %p153 = por %p151, %p152
      %p154 = scmp.ne.s32.totalorder %s142, %s143
      %p155 = scmp.eq.s32.totalorder %s28, 1
      %p156 = por %p154, %p155
      %p158 = scmp.ne.s32.totalorder %s143, %s157
      %p159 = scmp.eq.s32.totalorder %s28, 0
      %p160 = por %p158, %p159
      %s162 = sadd.s32 %s161, 1
      %p165 = scmp.eq.s32.totalorder %s22, 1
      %p166 = scmp.ne.s32.totalorder %s161, %s163
      %p167 = scmp.eq.s32.totalorder %s22, 0
      %p168 = por %p166, %p167
      %p169 = scmp.ne.s32.totalorder %s161, %s163
      %p170 = scmp.eq.s32.totalorder %s27, 1
      %p171 = por %p169, %p170
      %p172 = scmp.ne.s32.totalorder %s163, %s164
      %p173 = scmp.eq.s32.totalorder %s27, 0
      %p174 = por %p172, %p173
      %p175 = scmp.ne.s32.totalorder %s163, %s164
      %p176 = scmp.eq.s32.totalorder %s28, 1
      %p177 = por %p175, %p176
      %p179 = scmp.ne.s32.totalorder %s164, %s178
      %p180 = scmp.eq.s32.totalorder %s28, 0
      %p181 = por %p179, %p180
      %s183 = sadd.s32 %s182, 1
      %p186 = scmp.eq.s32.totalorder %s22, 1
      %p187 = scmp.ne.s32.totalorder %s182, %s184
      %p188 = scmp.eq.s32.totalorder %s22, 0
      %p189 = por %p187, %p188
      %p190 = scmp.ne.s32.totalorder %s182, %s184
      %p191 = scmp.eq.s32.totalorder %s27, 1
      %p192 = por %p190, %p191
      %p193 = scmp.ne.s32.totalorder %s184, %s185
      %p194 = scmp.eq.s32.totalorder %s27, 0
      %p195 = por %p193, %p194
      %p196 = scmp.ne.s32.totalorder %s184, %s185
      %p197 = scmp.eq.s32.totalorder %s28, 1
      %p198 = por %p196, %p197
      %p200 = scmp.ne.s32.totalorder %s185, %s199
      %p201 = scmp.eq.s32.totalorder %s28, 0
      %p202 = por %p200, %p201
      %s204 = sadd.s32 %s203, 1
      %p207 = scmp.eq.s32.totalorder %s22, 1
      %p208 = scmp.ne.s32.totalorder %s203, %s205
      %p209 = scmp.eq.s32.totalorder %s22, 0
      %p210 = por %p208, %p209
      %p211 = scmp.ne.s32.totalorder %s203, %s205
      %p212 = scmp.eq.s32.totalorder %s27, 1
      %p213 = por %p211, %p212
      %p214 = scmp.ne.s32.totalorder %s205, %s206
      %p215 = scmp.eq.s32.totalorder %s27, 0
      %p216 = por %p214, %p215
      %p217 = scmp.ne.s32.totalorder %s205, %s206
      %p218 = scmp.eq.s32.totalorder %s28, 1
      %p219 = por %p217, %p218
      %p221 = scmp.ne.s32.totalorder %s206, %s220
      %p222 = scmp.eq.s32.totalorder %s28, 0
      %p223 = por %p221, %p222
      %s225 = sadd.s32 %s224, 1
      %p228 = scmp.eq.s32.totalorder %s22, 1
      %p229 = scmp.ne.s32.totalorder %s224, %s226
      %p230 = scmp.eq.s32.totalorder %s22, 0
      %p231 = por %p229, %p230
      %p232 = scmp.ne.s32.totalorder %s224, %s226
      %p233 = scmp.eq.s32.totalorder %s27, 1
      %p234 = por %p232, %p233
      %p235 = scmp.ne.s32.totalorder %s226, %s227
      %p236 = scmp.eq.s32.totalorder %s27, 0
      %p237 = por %p235, %p236
      %p238 = scmp.ne.s32.totalorder %s226, %s227
      %p239 = scmp.eq.s32.totalorder %s28, 1
      %p240 = por %p238, %p239
      %p242 = scmp.ne.s32.totalorder %s227, %s241
      %p243 = scmp.eq.s32.totalorder %s28, 0
      %p244 = por %p242, %p243
      %s246 = sadd.s32 %s245, 1
      %p249 = scmp.eq.s32.totalorder %s22, 1
      %p250 = scmp.ne.s32.totalorder %s245, %s247
      %p251 = scmp.eq.s32.totalorder %s22, 0
      %p252 = por %p250, %p251
      %p253 = scmp.ne.s32.totalorder %s245, %s247
      %p254 = scmp.eq.s32.totalorder %s27, 1
      %p255 = por %p253, %p254
      %p256 = scmp.ne.s32.totalorder %s247, %s248
      %p257 = scmp.eq.s32.totalorder %s27, 0
      %p258 = por %p256, %p257
      %p259 = scmp.ne.s32.totalorder %s247, %s248
      %p260 = scmp.eq.s32.totalorder %s28, 1
      %p261 = por %p259, %p260
      %p263 = scmp.ne.s32.totalorder %s248, %s262
      %p264 = scmp.eq.s32.totalorder %s28, 0
      %p265 = por %p263, %p264
      %s267 = sadd.s32 %s266, 1
      %p270 = scmp.eq.s32.totalorder %s22, 1
      %p271 = scmp.ne.s32.totalorder %s266, %s268
      %p272 = scmp.eq.s32.totalorder %s22, 0
      %p273 = por %p271, %p272
      %p274 = scmp.ne.s32.totalorder %s266, %s268
      %p275 = scmp.eq.s32.totalorder %s27, 1
      %p276 = por %p274, %p275
      %p277 = scmp.ne.s32.totalorder %s268, %s269
      %p278 = scmp.eq.s32.totalorder %s27, 0
      %p279 = por %p277, %p278
      %p280 = scmp.ne.s32.totalorder %s268, %s269
      %p281 = scmp.eq.s32.totalorder %s28, 1
      %p282 = por %p280, %p281
      %p284 = scmp.ne.s32.totalorder %s269, %s283
      %p285 = scmp.eq.s32.totalorder %s28, 0
      %p286 = por %p284, %p285
      %s288 = sadd.s32 %s287, 1
      %p291 = scmp.eq.s32.totalorder %s22, 1
      %p292 = scmp.ne.s32.totalorder %s287, %s289
      %p293 = scmp.eq.s32.totalorder %s22, 0
      %p294 = por %p292, %p293
      %p295 = scmp.ne.s32.totalorder %s287, %s289
      %p296 = scmp.eq.s32.totalorder %s27, 1
      %p297 = por %p295, %p296
      %p298 = scmp.ne.s32.totalorder %s289, %s290
      %p299 = scmp.eq.s32.totalorder %s27, 0
      %p300 = por %p298, %p299
      %p301 = scmp.ne.s32.totalorder %s289, %s290
      %p302 = scmp.eq.s32.totalorder %s28, 1
      %p303 = por %p301, %p302
      %p305 = scmp.ne.s32.totalorder %s290, %s304
      %p306 = scmp.eq.s32.totalorder %s28, 0
      %p307 = por %p305, %p306
      %s308 = ssub.s32 %s22, %s29
      %p309 = scmp.eq.s32.totalorder %s308, 0
      %s311 = sadd.s32 %s310, 1
      %s312 = scalar_select %p309, %s310, %s311
      %p315 = pneg %p309
      %p316 = scmp.eq.s32.totalorder %s22, 1
      %p317 = por %p315, %p316
      %p318 = scmp.ne.s32.totalorder %s310, %s313
      %p319 = scmp.eq.s32.totalorder %s22, 0
      %p320 = por %p318, %p319
      %p321 = scmp.ne.s32.totalorder %s310, %s313
      %p322 = scmp.eq.s32.totalorder %s27, 1
      %p323 = por %p321, %p322
      %p324 = scmp.ne.s32.totalorder %s313, %s314
      %p325 = scmp.eq.s32.totalorder %s27, 0
      %p326 = por %p324, %p325
      %p327 = scmp.ne.s32.totalorder %s313, %s314
      %p328 = scmp.eq.s32.totalorder %s28, 1
      %p329 = por %p327, %p328
      %p331 = scmp.ne.s32.totalorder %s314, %s330
      %p332 = scmp.eq.s32.totalorder %s28, 0
      %p333 = por %p331, %p332
      %p334 = scmp.le.s32.totalorder 1, %s22
      %p335 = scmp.lt.s32.totalorder %s22, 3
      %p336 = pnand %p334, %p335
      %p337 = pneg %p336
      // Predicated region
      $region9: #{tpu_custom_call.1} parent=5 // pred_check
        _
      $region10: #{tpu_custom_call.1} parent=5 // pred_check_branch
        %339 = sbr.rel (%p336) target = $region12
      $region11: #{tpu_custom_call.1} parent=5 // pred_region
        %s340 = ssub.s32 %s22, 1
        // Predicated region
        $region13: #{tpu_custom_call.1} parent=11 // pred_check
          %p341 = pneg %p69
        $region14: #{tpu_custom_call.1} parent=11 // pred_check_branch
          %343 = sbr.rel (%p341) target = $region16
        $region15: #{tpu_custom_call.1} parent=11 // pred_region
          _
        $region16: #{tpu_custom_call.1} parent=11 // pred_fallthru
          _
        // Predicated region
        $region17: #{tpu_custom_call.1} parent=11 // pred_check
          %p344 = pneg %p90
        $region18: #{tpu_custom_call.1} parent=11 // pred_check_branch
          %346 = sbr.rel (%p344) target = $region20
        $region19: #{tpu_custom_call.1} parent=11 // pred_region
          _
        $region20: #{tpu_custom_call.1} parent=11 // pred_fallthru
          _
        // Predicated region
        $region21: #{tpu_custom_call.1} parent=11 // pred_check
          %p347 = pneg %p111
        $region22: #{tpu_custom_call.1} parent=11 // pred_check_branch
          %349 = sbr.rel (%p347) target = $region24
        $region23: #{tpu_custom_call.1} parent=11 // pred_region
          _
        $region24: #{tpu_custom_call.1} parent=11 // pred_fallthru
          _
        // Predicated region
        $region25: #{tpu_custom_call.1} parent=11 // pred_check
          %p350 = pneg %p132
        $region26: #{tpu_custom_call.1} parent=11 // pred_check_branch
          %352 = sbr.rel (%p350) target = $region28
        $region27: #{tpu_custom_call.1} parent=11 // pred_region
          _
        $region28: #{tpu_custom_call.1} parent=11 // pred_fallthru
          _
        // Predicated region
        $region29: #{tpu_custom_call.1} parent=11 // pred_check
          %p353 = pneg %p153
        $region30: #{tpu_custom_call.1} parent=11 // pred_check_branch
          %355 = sbr.rel (%p353) target = $region32
        $region31: #{tpu_custom_call.1} parent=11 // pred_region
          _
        $region32: #{tpu_custom_call.1} parent=11 // pred_fallthru
          _
        // Predicated region
        $region33: #{tpu_custom_call.1} parent=11 // pred_check
          %p356 = pneg %p174
        $region34: #{tpu_custom_call.1} parent=11 // pred_check_branch
          %358 = sbr.rel (%p356) target = $region36
        $region35: #{tpu_custom_call.1} parent=11 // pred_region
          _
        $region36: #{tpu_custom_call.1} parent=11 // pred_fallthru
          _
        // Predicated region
        $region37: #{tpu_custom_call.1} parent=11 // pred_check
          %p359 = pneg %p195
        $region38: #{tpu_custom_call.1} parent=11 // pred_check_branch
          %361 = sbr.rel (%p359) target = $region40
        $region39: #{tpu_custom_call.1} parent=11 // pred_region
          _
        $region40: #{tpu_custom_call.1} parent=11 // pred_fallthru
          _
        // Predicated region
        $region41: #{tpu_custom_call.1} parent=11 // pred_check
          %p362 = pneg %p216
        $region42: #{tpu_custom_call.1} parent=11 // pred_check_branch
          %364 = sbr.rel (%p362) target = $region44
        $region43: #{tpu_custom_call.1} parent=11 // pred_region
          _
        $region44: #{tpu_custom_call.1} parent=11 // pred_fallthru
          _
        // Predicated region
        $region45: #{tpu_custom_call.1} parent=11 // pred_check
          %p365 = pneg %p237
        $region46: #{tpu_custom_call.1} parent=11 // pred_check_branch
          %367 = sbr.rel (%p365) target = $region48
        $region47: #{tpu_custom_call.1} parent=11 // pred_region
          _
        $region48: #{tpu_custom_call.1} parent=11 // pred_fallthru
          _
        // Predicated region
        $region49: #{tpu_custom_call.1} parent=11 // pred_check
          %p368 = pneg %p258
        $region50: #{tpu_custom_call.1} parent=11 // pred_check_branch
          %370 = sbr.rel (%p368) target = $region52
        $region51: #{tpu_custom_call.1} parent=11 // pred_region
          _
        $region52: #{tpu_custom_call.1} parent=11 // pred_fallthru
          _
        // Predicated region
        $region53: #{tpu_custom_call.1} parent=11 // pred_check
          %p371 = pneg %p279
        $region54: #{tpu_custom_call.1} parent=11 // pred_check_branch
          %373 = sbr.rel (%p371) target = $region56
        $region55: #{tpu_custom_call.1} parent=11 // pred_region
          _
        $region56: #{tpu_custom_call.1} parent=11 // pred_fallthru
          _
        // Predicated region
        $region57: #{tpu_custom_call.1} parent=11 // pred_check
          %p374 = pneg %p300
        $region58: #{tpu_custom_call.1} parent=11 // pred_check_branch
          %376 = sbr.rel (%p374) target = $region60
        $region59: #{tpu_custom_call.1} parent=11 // pred_region
          _
        $region60: #{tpu_custom_call.1} parent=11 // pred_fallthru
          _
      $region12: #{tpu_custom_call.1} parent=5 // pred_fallthru
        _
      %p377 = scmp.lt.s32.totalorder %s22, 2
      // Predicated region
      $region61: #{tpu_custom_call.1} parent=5 // pred_check
        %p378 = pneg %p377
      $region62: #{tpu_custom_call.1} parent=5 // pred_check_branch
        %380 = sbr.rel (%p378) target = $region64
      $region63: #{tpu_custom_call.1} parent=5 // pred_region
        // Predicated region
        $region65: #{tpu_custom_call.1} parent=63 // pred_check
          %p381 = pneg %p42
        $region66: #{tpu_custom_call.1} parent=63 // pred_check_branch
          %383 = sbr.rel (%p381) target = $region68
        $region67: #{tpu_custom_call.1} parent=63 // pred_region
          %p384 = scmp.lt.s32.totalorder %s22, 1
          %s385 = scalar_select %p384, %s22, 1
          %s386 = smul.addr %s385, 8
          %s387 = scalar_lea.vmem %s0, %s386
        $region68: #{tpu_custom_call.1} parent=63 // pred_fallthru
          _
      $region64: #{tpu_custom_call.1} parent=5 // pred_fallthru
        _
      %p388 = scmp.le.s32.totalorder 1, %s22
      %p389 = scmp.lt.s32.totalorder %s22, 3
      %p390 = pnand %p388, %p389
      %p391 = pneg %p390
      // Predicated region
      $region69: #{tpu_custom_call.1} parent=5 // pred_check
        _
      $region70: #{tpu_custom_call.1} parent=5 // pred_check_branch
        %393 = sbr.rel (%p390) target = $region72
      $region71: #{tpu_custom_call.1} parent=5 // pred_region
        %s394 = ssub.s32 %s22, 1
        %p395 = scmp.lt.s32.totalorder %s27, 1
        %s396 = scalar_select %p395, %s27, 1
        %s397 = smul.addr %s396, 8
        %s398 = scalar_lea.vmem %s0, %s397
        %p399 = pneg %p48
        %p400 = pneg %p45
        %p401 = pneg %p69
        %p402 = pneg %p66
        %p403 = pneg %p90
        %p404 = pneg %p87
        %p405 = pneg %p111
        %p406 = pneg %p108
        %p407 = pneg %p132
        %p408 = pneg %p129
        %p409 = pneg %p153
        %p410 = pneg %p150
        %p411 = pneg %p174
        %p412 = pneg %p171
        %p413 = pneg %p195
        %p414 = pneg %p192
        %p415 = pneg %p216
        %p416 = pneg %p213
        %p417 = pneg %p237
        %p418 = pneg %p234
        %p419 = pneg %p258
        %p420 = pneg %p255
        %p421 = pneg %p279
        %p422 = pneg %p276
        %p423 = pneg %p300
        %p424 = pneg %p297
        %p425 = pneg %p326
        %p426 = pneg %p323
        %s427 = sand.u32 %s313, 1
        %s428 = scalar_lea.sflag [#allocation3], %s427
        %s429 = sand.u32 %s313, 1
        %s430 = smul.addr %s429, 8
        %s431 = scalar_lea.vmem [#allocation2], %s430
        %p432 = scmp.lt.s32.totalorder %s27, 1
        %s433 = scalar_select %p432, %s27, 1
        %s434 = smul.addr %s433, 8
        %s435 = scalar_lea.vmem %s0, %s434
        %v438 = vld [vmem:[%s435] sm:$0xff]
        %v439 = vld [vmem:[%s1] sm:$0x1]
        %v440 = vld [vmem:[%s2] sm:$0x1]
        %vm441 = vcmask 261120
        %v442 = vsel %vm441, %v438, 0.0
        %443 = vadd.xlane.f32.xlu0 %v442
        %v444 = vpop.xlane.xlu0 %443
        %v445 = vrcp.pop 32.0
        %v446 = vmul.f32 32.0, %v445
        %v447 = vsub.f32 1.0, %v446
        %v448 = vmul.f32 %v445, %v447
        %v449 = vadd.f32 %v445, %v448
        %vm450 = vweird.f32 %v445
        %v451 = vsel %vm450, %v445, %v449
        %v452 = vmul.f32 %v444, %v451
        %v453 = vsub.f32 %v438, %v452
        %v454 = vmul.f32 %v453, %v453
        %v455 = vsel %vm441, %v454, 0.0
        %456 = vadd.xlane.f32.xlu0 %v455
        %v457 = vpop.xlane.xlu0 %456
        %v458 = vmul.f32 %v457, %v451
        %v459 = vadd.f32 %v458, 1e-05
        %v460 = vrsqrt.pop %v459
        %v461 = vmul.f32 %v460, %v459
        %v462 = vmul.f32 %v461, %v460
        %v463 = vmul.f32 0.5, %v462
        %v464 = vsub.f32 1.5, %v463
        %v465 = vmul.f32 %v460, %v464
        %vm466 = vweird.f32 %v459
        %vm467 = vweird.f32 %v460
        %vm468 = vmor %vm466, %vm467
        %v469 = vsel %vm468, %v460, %v465
        %v470 = vmul.f32 %v453, %v469
        %v472 = vperm.slane %v439, 0
        %v474 = vmul.f32 %v470, %v472
        %v476 = vperm.slane %v440, 0
        %v478 = vadd.f32 %v474, %v476
        %v479 = vld [vmem:[%s3] sm:$0xf]
        %v480 = vld [vmem:[%s3 + $0x4] sm:$0xf]
        %v481 = vld [vmem:[%s3 + $0x8] sm:$0xf]
        %v482 = vld [vmem:[%s3 + $0xc] sm:$0xf]
        %v483 = vld [vmem:[%s3 + $0x10] sm:$0xf]
        %v484 = vld [vmem:[%s3 + $0x14] sm:$0xf]
        %v485 = vld [vmem:[%s3 + $0x18] sm:$0xf]
        %v486 = vld [vmem:[%s3 + $0x1c] sm:$0xf]
        %v487 = vld [vmem:[%s3 + $0x20] sm:$0xf]
        %v488 = vld [vmem:[%s3 + $0x24] sm:$0xf]
        %v489 = vld [vmem:[%s3 + $0x28] sm:$0xf]
        %v490 = vld [vmem:[%s3 + $0x2c] sm:$0xf]
        %v491 = vpack.c.bf16 %v478, %v478
        %v492 = vld [vmem:[%s4] sm:$0xff]
        %v493 = vld [vmem:[%s4 + $0x8] sm:$0xff]
        %v494 = vld [vmem:[%s4 + $0x10] sm:$0xff]
        %v495 = vld [vmem:[%s4 + $0x18] sm:$0xff]
        %v496 = vld [vmem:[%s4 + $0x20] sm:$0xff]
        %v497 = vld [vmem:[%s4 + $0x28] sm:$0xff]
        %v498 = vld [vmem:[%s4 + $0x30] sm:$0xff]
        %v499 = vld [vmem:[%s4 + $0x38] sm:$0xff]
        %v500 = vld [vmem:[%s4 + $0x40] sm:$0xff]
        %v501 = vld [vmem:[%s4 + $0x48] sm:$0xff]
        %v502 = vld [vmem:[%s4 + $0x50] sm:$0xff]
        %v503 = vld [vmem:[%s4 + $0x58] sm:$0xff]
        %505 = vset.pattern.permute.xlu0 0
        %506 = vperm.xlu0 %505, %v492
        %v507 = vpop.permute.xlu0 %506
        %510 = vset.pattern.permute.xlu0 0
        %511 = vperm.xlu0 %510, %v493
        %v512 = vpop.permute.xlu0 %511
        %515 = vset.pattern.permute.xlu0 0
        %516 = vperm.xlu0 %515, %v494
        %v517 = vpop.permute.xlu0 %516
        %520 = vset.pattern.permute.xlu0 0
        %521 = vperm.xlu0 %520, %v495
        %v522 = vpop.permute.xlu0 %521
        %525 = vset.pattern.permute.xlu0 0
        %526 = vperm.xlu0 %525, %v496
        %v527 = vpop.permute.xlu0 %526
        %530 = vset.pattern.permute.xlu0 0
        %531 = vperm.xlu0 %530, %v497
        %v532 = vpop.permute.xlu0 %531
        %535 = vset.pattern.permute.xlu0 0
        %536 = vperm.xlu0 %535, %v498
        %v537 = vpop.permute.xlu0 %536
        %540 = vset.pattern.permute.xlu0 0
        %541 = vperm.xlu0 %540, %v499
        %v542 = vpop.permute.xlu0 %541
        %545 = vset.pattern.permute.xlu0 0
        %546 = vperm.xlu0 %545, %v500
        %v547 = vpop.permute.xlu0 %546
        %550 = vset.pattern.permute.xlu0 0
        %551 = vperm.xlu0 %550, %v501
        %v552 = vpop.permute.xlu0 %551
        %555 = vset.pattern.permute.xlu0 0
        %556 = vperm.xlu0 %555, %v502
        %v557 = vpop.permute.xlu0 %556
        %560 = vset.pattern.permute.xlu0 0
        %561 = vperm.xlu0 %560, %v503
        %v562 = vpop.permute.xlu0 %561
        %v576 = vunpack.c.l.b16 %v479
        %v577 = vunpack.c.l.b16 %v480
        %v578 = vunpack.c.l.b16 %v481
        %v579 = vunpack.c.l.b16 %v482
        %v580 = vunpack.c.l.b16 %v483
        %v581 = vunpack.c.l.b16 %v484
        %v582 = vunpack.c.l.b16 %v485
        %v583 = vunpack.c.l.b16 %v486
        %v584 = vunpack.c.l.b16 %v487
        %v585 = vunpack.c.l.b16 %v488
        %v586 = vunpack.c.l.b16 %v489
        %v587 = vunpack.c.l.b16 %v490
        %v588 = vpack.c.b16 %v577, %v576
        %v589 = vpack.c.b16 %v579, %v578
        %v590 = vpack.c.b16 %v581, %v580
        %v591 = vpack.c.b16 %v583, %v582
        %v592 = vpack.c.b16 %v585, %v584
        %v593 = vpack.c.b16 %v587, %v586
        %v595 = vsel %vm441, %v588, 0
        %v598 = vsel %vm441, %v589, 0
        %v601 = vsel %vm441, %v590, 0
        %v604 = vsel %vm441, %v591, 0
        %v607 = vsel %vm441, %v592, 0
        %v610 = vsel %vm441, %v593, 0
        %v613 = vsel %vm441, %v491, 0
        %615 = vmatpush.bf16.xpose.msra.mxu0 0
        %616 = vmatpush.bf16.xpose.msra.mxu0 0
        %617 = vmatpush.bf16.xpose.msra.mxu0 0
        %618 = vmatpush.bf16.xpose.msra.mxu0 0
        %619 = vmatpush.bf16.xpose.msra.mxu0 0
        %620 = vmatpush.bf16.xpose.msra.mxu0 0
        %621 = vmatpush.bf16.xpose.msra.mxu0 0
        %622 = vmatpush.bf16.xpose.msra.mxu0 %v613
        %623 = vmatmul.bf16.gmra.mxu0 %v595
        %v624 = vpop.f32.mrf.mxu0
        %v625 = vadd.f32 %v507, %v624
        %v626 = vpop.f32.mrf.mxu0
        %v627 = vadd.f32 %v512, %v626
        %628 = vmatmul.bf16.gmra.mxu0 %v598
        %v629 = vpop.f32.mrf.mxu0
        %v630 = vadd.f32 %v517, %v629
        %v631 = vpop.f32.mrf.mxu0
        %v632 = vadd.f32 %v522, %v631
        %633 = vmatmul.bf16.gmra.mxu0 %v601
        %v634 = vpop.f32.mrf.mxu0
        %v635 = vadd.f32 %v527, %v634
        %v636 = vpop.f32.mrf.mxu0
        %v637 = vadd.f32 %v532, %v636
        %638 = vmatmul.bf16.gmra.mxu0 %v604
        %v639 = vpop.f32.mrf.mxu0
        %v640 = vadd.f32 %v537, %v639
        %v641 = vpop.f32.mrf.mxu0
        %v642 = vadd.f32 %v542, %v641
        %643 = vmatmul.bf16.gmra.mxu0 %v607
        %v644 = vpop.f32.mrf.mxu0
        %v645 = vadd.f32 %v547, %v644
        %v646 = vpop.f32.mrf.mxu0
        %v647 = vadd.f32 %v552, %v646
        %648 = vmatmul.bf16.gmra.mxu0 %v610
        %v649 = vpop.f32.mrf.mxu0
        %v650 = vadd.f32 %v557, %v649
        %v651 = vpop.f32.mrf.mxu0
        %v652 = vadd.f32 %v562, %v651
        %653 = vdwg.mxu0
        %v654 = vpack.c.bf16 %v625, %v625
        %v655 = vpack.c.bf16 %v627, %v627
        %v656 = vpack.c.bf16 %v630, %v630
        %v657 = vpack.c.bf16 %v632, %v632
        %v658 = vpack.c.bf16 %v635, %v635
        %v659 = vpack.c.bf16 %v637, %v637
        %v660 = vpack.c.bf16 %v640, %v640
        %v661 = vpack.c.bf16 %v642, %v642
        %v662 = vpack.c.bf16 %v645, %v645
        %v663 = vpack.c.bf16 %v647, %v647
        %v664 = vpack.c.bf16 %v650, %v650
        %v665 = vpack.c.bf16 %v652, %v652
        %666 = vxpose.xlu0.c.b16.start [1/8] %v654, 128
        %667 = vxpose.xlu0.c.b16.cont [2/8] 0, 128
        %668 = vxpose.xlu0.c.b16.cont [3/8] 0, 128
        %669 = vxpose.xlu0.c.b16.cont [4/8] 0, 128
        %670 = vxpose.xlu0.c.b16.cont [5/8] 0, 128
        %671 = vxpose.xlu0.c.b16.cont [6/8] 0, 128
        %672 = vxpose.xlu0.c.b16.cont [7/8] 0, 128
        %673 = vxpose.xlu0.c.b16.end [8/8] 0, 128
        %v674 = vpop.trf.xlu0
        %v675 = vpop.trf.xlu0
        %v676 = vpop.trf.xlu0
        %v677 = vpop.trf.xlu0
        %v678 = vpop.trf.xlu0
        %v679 = vpop.trf.xlu0
        %v680 = vpop.trf.xlu0
        %v681 = vpop.trf.xlu0
        %vm682 = vcmask 64512
        %v684 = vsel %vm682, %v674, 0
        %vm686 = vcmask 1043456
        %v688 = vsel %vm686, %v658, 0
        %690 = vmatpush.bf16.msra.mxu0 0
        %691 = vmatpush.bf16.msra.mxu0 0
        %692 = vmatpush.bf16.msra.mxu0 0
        %693 = vmatpush.bf16.msra.mxu0 0
        %694 = vmatpush.bf16.msra.mxu0 0
        %695 = vmatpush.bf16.msra.mxu0 0
        %696 = vmatpush.bf16.msra.mxu0 0
        %697 = vmatpush.bf16.msra.mxu0 %v688
        %698 = vmatmul.bf16.gmra.mxu0 %v684
        %v699 = vpop.f32.mrf.mxu0
        %v700 = vadd.f32 0.0, %v699
        %v701 = vpop.f32.mrf.mxu0
        %702 = vdwg.mxu0
        %703 = vxpose.xlu0.c.b16.start [1/8] %v655, 128
        %704 = vxpose.xlu0.c.b16.cont [2/8] 0, 128
        %705 = vxpose.xlu0.c.b16.cont [3/8] 0, 128
        %706 = vxpose.xlu0.c.b16.cont [4/8] 0, 128
        %707 = vxpose.xlu0.c.b16.cont [5/8] 0, 128
        %708 = vxpose.xlu0.c.b16.cont [6/8] 0, 128
        %709 = vxpose.xlu0.c.b16.cont [7/8] 0, 128
        %710 = vxpose.xlu0.c.b16.end [8/8] 0, 128
        %v711 = vpop.trf.xlu0
        %v712 = vpop.trf.xlu0
        %v713 = vpop.trf.xlu0
        %v714 = vpop.trf.xlu0
        %v715 = vpop.trf.xlu0
        %v716 = vpop.trf.xlu0
        %v717 = vpop.trf.xlu0
        %v718 = vpop.trf.xlu0
        %v720 = vsel %vm682, %v711, 0
        %v723 = vsel %vm686, %v659, 0
        %725 = vmatpush.bf16.msra.mxu0 0
        %726 = vmatpush.bf16.msra.mxu0 0
        %727 = vmatpush.bf16.msra.mxu0 0
        %728 = vmatpush.bf16.msra.mxu0 0
        %729 = vmatpush.bf16.msra.mxu0 0
        %730 = vmatpush.bf16.msra.mxu0 0
        %731 = vmatpush.bf16.msra.mxu0 0
        %732 = vmatpush.bf16.msra.mxu0 %v723
        %733 = vmatmul.bf16.gmra.mxu0 %v720
        %v734 = vpop.f32.mrf.mxu0
        %v735 = vadd.f32 0.0, %v734
        %v736 = vpop.f32.mrf.mxu0
        %737 = vdwg.mxu0
        %738 = vxpose.xlu0.c.b16.start [1/8] %v656, 128
        %739 = vxpose.xlu0.c.b16.cont [2/8] 0, 128
        %740 = vxpose.xlu0.c.b16.cont [3/8] 0, 128
        %741 = vxpose.xlu0.c.b16.cont [4/8] 0, 128
        %742 = vxpose.xlu0.c.b16.cont [5/8] 0, 128
        %743 = vxpose.xlu0.c.b16.cont [6/8] 0, 128
        %744 = vxpose.xlu0.c.b16.cont [7/8] 0, 128
        %745 = vxpose.xlu0.c.b16.end [8/8] 0, 128
        %v746 = vpop.trf.xlu0
        %v747 = vpop.trf.xlu0
        %v748 = vpop.trf.xlu0
        %v749 = vpop.trf.xlu0
        %v750 = vpop.trf.xlu0
        %v751 = vpop.trf.xlu0
        %v752 = vpop.trf.xlu0
        %v753 = vpop.trf.xlu0
        %v755 = vsel %vm682, %v746, 0
        %v758 = vsel %vm686, %v660, 0
        %760 = vmatpush.bf16.msra.mxu0 0
        %761 = vmatpush.bf16.msra.mxu0 0
        %762 = vmatpush.bf16.msra.mxu0 0
        %763 = vmatpush.bf16.msra.mxu0 0
        %764 = vmatpush.bf16.msra.mxu0 0
        %765 = vmatpush.bf16.msra.mxu0 0
        %766 = vmatpush.bf16.msra.mxu0 0
        %767 = vmatpush.bf16.msra.mxu0 %v758
        %768 = vmatmul.bf16.gmra.mxu0 %v755
        %v769 = vpop.f32.mrf.mxu0
        %v770 = vadd.f32 0.0, %v769
        %v771 = vpop.f32.mrf.mxu0
        %772 = vdwg.mxu0
        %773 = vxpose.xlu0.c.b16.start [1/8] %v657, 128
        %774 = vxpose.xlu0.c.b16.cont [2/8] 0, 128
        %775 = vxpose.xlu0.c.b16.cont [3/8] 0, 128
        %776 = vxpose.xlu0.c.b16.cont [4/8] 0, 128
        %777 = vxpose.xlu0.c.b16.cont [5/8] 0, 128
        %778 = vxpose.xlu0.c.b16.cont [6/8] 0, 128
        %779 = vxpose.xlu0.c.b16.cont [7/8] 0, 128
        %780 = vxpose.xlu0.c.b16.end [8/8] 0, 128
        %v781 = vpop.trf.xlu0
        %v782 = vpop.trf.xlu0
        %v783 = vpop.trf.xlu0
        %v784 = vpop.trf.xlu0
        %v785 = vpop.trf.xlu0
        %v786 = vpop.trf.xlu0
        %v787 = vpop.trf.xlu0
        %v788 = vpop.trf.xlu0
        %v790 = vsel %vm682, %v781, 0
        %v793 = vsel %vm686, %v661, 0
        %795 = vmatpush.bf16.msra.mxu0 0
        %796 = vmatpush.bf16.msra.mxu0 0
        %797 = vmatpush.bf16.msra.mxu0 0
        %798 = vmatpush.bf16.msra.mxu0 0
        %799 = vmatpush.bf16.msra.mxu0 0
        %800 = vmatpush.bf16.msra.mxu0 0
        %801 = vmatpush.bf16.msra.mxu0 0
        %802 = vmatpush.bf16.msra.mxu0 %v793
        %803 = vmatmul.bf16.gmra.mxu0 %v790
        %v804 = vpop.f32.mrf.mxu0
        %v805 = vadd.f32 0.0, %v804
        %v806 = vpop.f32.mrf.mxu0
        %807 = vdwg.mxu0
        %v808 = vsel %vm682, %v700, -inf
        %809 = vmax.xlane.f32.xlu0 %v808
        %v810 = vpop.xlane.xlu0 %809
        %v811 = vsel %vm682, %v735, -inf
        %812 = vmax.xlane.f32.xlu0 %v811
        %v813 = vpop.xlane.xlu0 %812
        %v814 = vsel %vm682, %v770, -inf
        %815 = vmax.xlane.f32.xlu0 %v814
        %v816 = vpop.xlane.xlu0 %815
        %v817 = vsel %vm682, %v805, -inf
        %818 = vmax.xlane.f32.xlu0 %v817
        %v819 = vpop.xlane.xlu0 %818
        %v820 = vsub.f32 %v700, %v810
        %v821 = vsub.f32 %v735, %v813
        %v822 = vsub.f32 %v770, %v816
        %v823 = vsub.f32 %v805, %v819
        %v824 = vpack.c.bf16 %v820, %v820
        %v825 = vpack.c.bf16 %v821, %v821
        %v826 = vpack.c.bf16 %v822, %v822
        %v827 = vpack.c.bf16 %v823, %v823
        %v828 = vunpack.c.l.bf16 %v824
        %v829 = vunpack.c.l.bf16 %v825
        %v830 = vunpack.c.l.bf16 %v826
        %v831 = vunpack.c.l.bf16 %v827
        %v832 = vmul.f32 %v828, 1.442695
        %v833 = vpow.pop %v832
        %v834 = vmul.f32 %v829, 1.442695
        %v835 = vpow.pop %v834
        %v836 = vmul.f32 %v830, 1.442695
        %v837 = vpow.pop %v836
        %v838 = vmul.f32 %v831, 1.442695
        %v839 = vpow.pop %v838
        %v840 = vpack.c.bf16 %v833, %v833
        %v841 = vpack.c.bf16 %v835, %v835
        %v842 = vpack.c.bf16 %v837, %v837
        %v843 = vpack.c.bf16 %v839, %v839
        %v844 = vunpack.c.l.bf16 %v840
        %v845 = vunpack.c.l.bf16 %v841
        %v846 = vunpack.c.l.bf16 %v842
        %v847 = vunpack.c.l.bf16 %v843
        %v848 = vsel %vm682, %v844, 0.0
        %849 = vadd.xlane.f32.xlu0 %v848
        %v850 = vpop.xlane.xlu0 %849
        %v851 = vsel %vm682, %v845, 0.0
        %852 = vadd.xlane.f32.xlu0 %v851
        %v853 = vpop.xlane.xlu0 %852
        %v854 = vsel %vm682, %v846, 0.0
        %855 = vadd.xlane.f32.xlu0 %v854
        %v856 = vpop.xlane.xlu0 %855
        %v857 = vsel %vm682, %v847, 0.0
        %858 = vadd.xlane.f32.xlu0 %v857
        %v859 = vpop.xlane.xlu0 %858
        %v860 = vrcp.pop %v850
        %v861 = vrcp.pop %v853
        %v862 = vrcp.pop %v856
        %v863 = vrcp.pop %v859
        %v864 = vmul.f32 %v844, %v860
        %v865 = vmul.f32 %v845, %v861
        %v866 = vmul.f32 %v846, %v862
        %v867 = vmul.f32 %v847, %v863
        %v868 = vpack.c.bf16 %v864, %v864
        %v869 = vpack.c.bf16 %v865, %v865
        %v870 = vpack.c.bf16 %v866, %v866
        %v871 = vpack.c.bf16 %v867, %v867
        %v873 = vsel %vm682, %v662, 0
        %v876 = vsel %vm682, %v868, 0
        %878 = vmatpush.bf16.xpose.msra.mxu0 0
        %879 = vmatpush.bf16.xpose.msra.mxu0 0
        %880 = vmatpush.bf16.xpose.msra.mxu0 0
        %881 = vmatpush.bf16.xpose.msra.mxu0 0
        %882 = vmatpush.bf16.xpose.msra.mxu0 0
        %883 = vmatpush.bf16.xpose.msra.mxu0 0
        %884 = vmatpush.bf16.xpose.msra.mxu0 0
        %885 = vmatpush.bf16.xpose.msra.mxu0 %v876
        %886 = vmatmul.bf16.gmra.mxu0 %v873
        %v887 = vpop.f32.mrf.mxu0
        %v888 = vadd.f32 0.0, %v887
        %v889 = vpop.f32.mrf.mxu0
        %890 = vdwg.mxu0
        %v892 = vsel %vm682, %v663, 0
        %v895 = vsel %vm682, %v869, 0
        %897 = vmatpush.bf16.xpose.msra.mxu0 0
        %898 = vmatpush.bf16.xpose.msra.mxu0 0
        %899 = vmatpush.bf16.xpose.msra.mxu0 0
        %900 = vmatpush.bf16.xpose.msra.mxu0 0
        %901 = vmatpush.bf16.xpose.msra.mxu0 0
        %902 = vmatpush.bf16.xpose.msra.mxu0 0
        %903 = vmatpush.bf16.xpose.msra.mxu0 0
        %904 = vmatpush.bf16.xpose.msra.mxu0 %v895
        %905 = vmatmul.bf16.gmra.mxu0 %v892
        %v906 = vpop.f32.mrf.mxu0
        %v907 = vadd.f32 0.0, %v906
        %v908 = vpop.f32.mrf.mxu0
        %909 = vdwg.mxu0
        %v911 = vsel %vm682, %v664, 0
        %v914 = vsel %vm682, %v870, 0
        %916 = vmatpush.bf16.xpose.msra.mxu0 0
        %917 = vmatpush.bf16.xpose.msra.mxu0 0
        %918 = vmatpush.bf16.xpose.msra.mxu0 0
        %919 = vmatpush.bf16.xpose.msra.mxu0 0
        %920 = vmatpush.bf16.xpose.msra.mxu0 0
        %921 = vmatpush.bf16.xpose.msra.mxu0 0
        %922 = vmatpush.bf16.xpose.msra.mxu0 0
        %923 = vmatpush.bf16.xpose.msra.mxu0 %v914
        %924 = vmatmul.bf16.gmra.mxu0 %v911
        %v925 = vpop.f32.mrf.mxu0
        %v926 = vadd.f32 0.0, %v925
        %v927 = vpop.f32.mrf.mxu0
        %928 = vdwg.mxu0
        %v930 = vsel %vm682, %v665, 0
        %v933 = vsel %vm682, %v871, 0
        %935 = vmatpush.bf16.xpose.msra.mxu0 0
        %936 = vmatpush.bf16.xpose.msra.mxu0 0
        %937 = vmatpush.bf16.xpose.msra.mxu0 0
        %938 = vmatpush.bf16.xpose.msra.mxu0 0
        %939 = vmatpush.bf16.xpose.msra.mxu0 0
        %940 = vmatpush.bf16.xpose.msra.mxu0 0
        %941 = vmatpush.bf16.xpose.msra.mxu0 0
        %942 = vmatpush.bf16.xpose.msra.mxu0 %v933
        %943 = vmatmul.bf16.gmra.mxu0 %v930
        %v944 = vpop.f32.mrf.mxu0
        %v945 = vadd.f32 0.0, %v944
        %v946 = vpop.f32.mrf.mxu0
        %947 = vdwg.mxu0
        %v948 = vpack.c.bf16 %v907, %v888
        %v949 = vpack.c.bf16 %v945, %v926
        %v950 = vld [vmem:[%s5] sm:$0xf]
        %v951 = vld [vmem:[%s5 + $0x4] sm:$0xf]
        %v952 = vld [vmem:[%s5 + $0x8] sm:$0xf]
        %v953 = vld [vmem:[%s5 + $0xc] sm:$0xf]
        %v954 = vld [vmem:[%s6] sm:$0x1]
        %v956 = vperm.slane %v954, 0
        %958 = vxpose.xlu0.c.b16.start [1/8] %v948, 128
        %959 = vxpose.xlu0.c.b16.cont [2/8] %v949, 128
        %960 = vxpose.xlu0.c.b16.cont [3/8] 0, 128
        %961 = vxpose.xlu0.c.b16.cont [4/8] 0, 128
        %962 = vxpose.xlu0.c.b16.cont [5/8] 0, 128
        %963 = vxpose.xlu0.c.b16.cont [6/8] 0, 128
        %964 = vxpose.xlu0.c.b16.cont [7/8] 0, 128
        %965 = vxpose.xlu0.c.b16.end [8/8] 0, 128
        %v966 = vpop.trf.xlu0
        %v967 = vpop.trf.xlu0
        %v968 = vpop.trf.xlu0
        %v969 = vpop.trf.xlu0
        %v970 = vpop.trf.xlu0
        %v971 = vpop.trf.xlu0
        %v972 = vpop.trf.xlu0
        %v973 = vpop.trf.xlu0
        %v978 = vunpack.c.l.b16 %v950
        %v979 = vunpack.c.l.b16 %v951
        %v980 = vunpack.c.l.b16 %v952
        %v981 = vunpack.c.l.b16 %v953
        %v982 = vpack.c.b16 %v979, %v978
        %v983 = vpack.c.b16 %v981, %v980
        %v987 = vsel %vm441, %v966, 0
        %989 = vmatpush.bf16.msra.mxu0 0
        %990 = vmatpush.bf16.msra.mxu0 0
        %991 = vmatpush.bf16.msra.mxu0 0
        %992 = vmatpush.bf16.msra.mxu0 0
        %993 = vmatpush.bf16.msra.mxu0 0
        %994 = vmatpush.bf16.msra.mxu0 0
        %995 = vmatpush.bf16.msra.mxu0 %v983
        %996 = vmatpush.bf16.msra.mxu0 %v982
        %997 = vmatmul.bf16.gmra.mxu0 %v987
        %v998 = vpop.f32.mrf.mxu0
        %v999 = vadd.f32 %v956, %v998
        %v1000 = vpop.f32.mrf.mxu0
        %1001 = vdwg.mxu0
        %v1002 = vadd.f32 %v438, %v999
        %v1003 = vld [vmem:[%s7] sm:$0x1]
        %v1004 = vld [vmem:[%s8] sm:$0x1]
        %v1005 = vsel %vm441, %v1002, 0.0
        %1006 = vadd.xlane.f32.xlu0 %v1005
        %v1007 = vpop.xlane.xlu0 %1006
        %v1008 = vmul.f32 %v1007, %v451
        %v1009 = vsub.f32 %v1002, %v1008
        %v1010 = vmul.f32 %v1009, %v1009
        %v1011 = vsel %vm441, %v1010, 0.0
        %1012 = vadd.xlane.f32.xlu0 %v1011
        %v1013 = vpop.xlane.xlu0 %1012
        %v1014 = vmul.f32 %v1013, %v451
        %v1015 = vadd.f32 %v1014, 1e-05
        %v1016 = vrsqrt.pop %v1015
        %v1017 = vmul.f32 %v1016, %v1015
        %v1018 = vmul.f32 %v1017, %v1016
        %v1019 = vmul.f32 0.5, %v1018
        %v1020 = vsub.f32 1.5, %v1019
        %v1021 = vmul.f32 %v1016, %v1020
        %vm1022 = vweird.f32 %v1015
        %vm1023 = vweird.f32 %v1016
        %vm1024 = vmor %vm1022, %vm1023
        %v1025 = vsel %vm1024, %v1016, %v1021
        %v1026 = vmul.f32 %v1009, %v1025
        %v1028 = vperm.slane %v1003, 0
        %v1030 = vmul.f32 %v1026, %v1028
        %v1032 = vperm.slane %v1004, 0
        %v1034 = vadd.f32 %v1030, %v1032
        %v1035 = vpack.c.bf16 %v1034, %v1034
        %v1036 = vld [vmem:[%s9] sm:$0xf]
        %v1037 = vld [vmem:[%s9 + $0x4] sm:$0xf]
        %v1038 = vld [vmem:[%s9 + $0x8] sm:$0xf]
        %v1039 = vld [vmem:[%s9 + $0xc] sm:$0xf]
        %v1040 = vld [vmem:[%s10] sm:$0x1]
        %v1042 = vperm.slane %v1040, 0
        %v1048 = vunpack.c.l.b16 %v1036
        %v1049 = vunpack.c.l.b16 %v1037
        %v1050 = vunpack.c.l.b16 %v1038
        %v1051 = vunpack.c.l.b16 %v1039
        %v1052 = vpack.c.b16 %v1049, %v1048
        %v1053 = vpack.c.b16 %v1051, %v1050
        %v1057 = vsel %vm441, %v1035, 0
        %1059 = vmatpush.bf16.msra.mxu0 0
        %1060 = vmatpush.bf16.msra.mxu0 0
        %1061 = vmatpush.bf16.msra.mxu0 0
        %1062 = vmatpush.bf16.msra.mxu0 0
        %1063 = vmatpush.bf16.msra.mxu0 0
        %1064 = vmatpush.bf16.msra.mxu0 0
        %1065 = vmatpush.bf16.msra.mxu0 %v1053
        %1066 = vmatpush.bf16.msra.mxu0 %v1052
        %1067 = vmatmul.bf16.gmra.mxu0 %v1057
        %v1068 = vpop.f32.mrf.mxu0
        %v1069 = vadd.f32 %v1042, %v1068
        %v1070 = vpop.f32.mrf.mxu0
        %1071 = vdwg.mxu0
        %v1072 = vpack.c.bf16 %v1069, %v1069
        %v1073 = vunpack.c.l.bf16 %v1072
        %v1074 = vmul.f32 %v1073, 1.703125
        %v1075 = vpack.c.bf16 %v1074, %v1074
        %v1076 = vxor.u32 %v1075, 2147516416
        %v1077 = vunpack.c.l.bf16 %v1076
        %v1078 = vmul.f32 %v1077, 1.442695
        %v1079 = vpow.pop %v1078
        %v1080 = vpack.c.bf16 %v1079, %v1079
        %v1081 = vunpack.c.l.bf16 %v1080
        %v1082 = vadd.f32 %v1081, 1.0
        %v1083 = vpack.c.bf16 %v1082, %v1082
        %v1084 = vunpack.c.h.bf16 1065369472
        %v1085 = vunpack.c.l.bf16 1065369472
        %v1086 = vunpack.c.h.bf16 %v1083
        %v1087 = vunpack.c.l.bf16 %v1083
        %v1088 = vrcp.pop %v1086
        %v1089 = vmul.f32 %v1084, %v1088
        %v1090 = vrcp.pop %v1087
        %v1091 = vmul.f32 %v1085, %v1090
        %v1092 = vpack.c.bf16 %v1089, %v1091
        %v1093 = vunpack.c.l.bf16 %v1092
        %v1094 = vmul.f32 %v1073, %v1093
        %v1095 = vpack.c.bf16 %v1094, %v1094
        %v1096 = vld [vmem:[%s11] sm:$0xf]
        %v1097 = vld [vmem:[%s11 + $0x4] sm:$0xf]
        %v1098 = vld [vmem:[%s11 + $0x8] sm:$0xf]
        %v1099 = vld [vmem:[%s11 + $0xc] sm:$0xf]
        %v1100 = vld [vmem:[%s11 + $0x10] sm:$0xf]
        %v1101 = vld [vmem:[%s11 + $0x14] sm:$0xf]
        %v1102 = vld [vmem:[%s11 + $0x18] sm:$0xf]
        %v1103 = vld [vmem:[%s11 + $0x1c] sm:$0xf]
        %v1104 = vld [vmem:[%s12] sm:$0x1]
        %v1106 = vperm.slane %v1104, 0
        %v1116 = vunpack.c.l.b16 %v1096
        %v1117 = vunpack.c.l.b16 %v1097
        %v1118 = vunpack.c.l.b16 %v1098
        %v1119 = vunpack.c.l.b16 %v1099
        %v1120 = vunpack.c.l.b16 %v1100
        %v1121 = vunpack.c.l.b16 %v1101
        %v1122 = vunpack.c.l.b16 %v1102
        %v1123 = vunpack.c.l.b16 %v1103
        %v1124 = vpack.c.b16 %v1117, %v1116
        %v1125 = vpack.c.b16 %v1119, %v1118
        %v1126 = vpack.c.b16 %v1121, %v1120
        %v1127 = vpack.c.b16 %v1123, %v1122
        %vm1132 = vcmask 523264
        %v1134 = vsel %vm1132, %v1095, 0
        %1136 = vmatpush.bf16.msra.mxu0 0
        %1137 = vmatpush.bf16.msra.mxu0 0
        %1138 = vmatpush.bf16.msra.mxu0 0
        %1139 = vmatpush.bf16.msra.mxu0 0
        %1140 = vmatpush.bf16.msra.mxu0 %v1127
        %1141 = vmatpush.bf16.msra.mxu0 %v1126
        %1142 = vmatpush.bf16.msra.mxu0 %v1125
        %1143 = vmatpush.bf16.msra.mxu0 %v1124
        %1144 = vmatmul.bf16.gmra.mxu0 %v1134
        %v1145 = vpop.f32.mrf.mxu0
        %v1146 = vadd.f32 %v1106, %v1145
        %v1147 = vpop.f32.mrf.mxu0
        %1148 = vdwg.mxu0
        %v1149 = vadd.f32 %v1002, %v1146
        %1150 = vst.msk [vmem:[%s431] sm:$0xff] %vm441, %v1149
        %s1151 = sand.u32 %s313, 1
        %s1152 = scalar_lea.sflag [#allocation3], %s1151
        %s1153 = sand.u32 %s313, 1
        %s1154 = smul.addr %s1153, 8
        %s1155 = scalar_lea.vmem [#allocation2], %s1154
        // Predicated region
        $region73: #{tpu_custom_call.1} parent=71 // pred_check
          %p1156 = pneg %p323
        $region74: #{tpu_custom_call.1} parent=71 // pred_check_branch
          %1158 = sbr.rel (%p1156) target = $region76
        $region75: #{tpu_custom_call.1} parent=71 // pred_region
          %1160 = vsyncadd %s1152, 0
          %s1161 = smul.addr %s27, 8
          %s1162 = scalar_lea.hbm %s13, %s1161
          %s1164 = sshll.u32 %s1155, 4
          %s1165 = int_to_ptr.vmem [resolvable:$true] %s1164
          %s1166 = sshll.u32 %s1162, 4
          %s1167 = int_to_ptr.hbm [resolvable:$true] %s1166
          %1169 = dma.vmem_to_hbm [thread:$0]  %s1165, 128, %s1167, %s1152
        $region76: #{tpu_custom_call.1} parent=71 // pred_fallthru
          _
      $region72: #{tpu_custom_call.1} parent=5 // pred_fallthru
        _
      %p1170 = scmp.le.s32.totalorder 2, %s22
      // Predicated region
      $region77: #{tpu_custom_call.1} parent=5 // pred_check
        %p1171 = pneg %p1170
      $region78: #{tpu_custom_call.1} parent=5 // pred_check_branch
        %1173 = sbr.rel (%p1171) target = $region80
      $region79: #{tpu_custom_call.1} parent=5 // pred_region
        %s1174 = ssub.s32 %s22, 2
        // Predicated region
        $region81: #{tpu_custom_call.1} parent=79 // pred_check
          %p1175 = pneg %p329
        $region82: #{tpu_custom_call.1} parent=79 // pred_check_branch
          %1177 = sbr.rel (%p1175) target = $region84
        $region83: #{tpu_custom_call.1} parent=79 // pred_region
          %s1178 = sand.u32 %s314, 1
          %s1179 = scalar_lea.sflag [#allocation3], %s1178
          %s1180 = sand.u32 %s314, 1
          %s1181 = smul.addr %s1180, 8
          %s1182 = scalar_lea.vmem [#allocation2], %s1181
          %1184 = dma.done %s1179, 128
        $region84: #{tpu_custom_call.1} parent=79 // pred_fallthru
          _
      $region80: #{tpu_custom_call.1} parent=5 // pred_fallthru
        _
    $region6: #{tpu_custom_call.1} parent=1 // loop_footer
      %s26 = sadd.s32 1, %s22
    $region7: #{tpu_custom_call.1} parent=1 // loop_footer_branch
      %21 = sbr.rel target = $region3
    $region8: #{tpu_custom_call.1} parent=1 // loop_exit
      _
    %1185 = vsyncpa [#allocation3], 1
    %s1186 = scalar_lea.sflag [#allocation3], 1
    %1187 = vsyncpa %s1186, 1

</llo_original>
